<compile_context>
chip_gen: v6e
topology: v6e:2x2x1
jax: 0.10.0
libtpu: 0.0.40
codegen_flags: <defaults>
</compile_context>

<pallas_src>
import functools

import jax
import jax.numpy as jnp
from jax.experimental import pallas as pl
from jax.experimental.pallas import tpu as pltpu


def _round_up(x, m):
    return (x + m - 1) // m * m


def _choose_h_chunk(hp):
    """Pick a hidden-dim chunk width (hp is always a multiple of 128)."""
    if hp <= 512:
        return hp
    for c in (512, 256, 128):
        if hp % c == 0:
            return c
    return hp


def _pick_tm(cp, hp, h_chunk, x_bytes, w_bytes, budget_bytes):
    """Largest row tile whose VMEM footprint fits the budget.

    Weights are conservatively counted as double-buffered (the fallback path
    when pipeline_mode=pl.Buffered(1) is unavailable).
    """
    weight_bytes = 2 * (2 * cp * hp * w_bytes + (hp + 3 * cp) * 4)
    for cand in (1024, 512, 256, 128, 64, 32, 16, 8):
        per_row = 2 * cp * x_bytes          # x tile, double-buffered
        per_row += 2 * cp * x_bytes         # out tile, double-buffered
        per_row += (h_chunk + 2 * cp) * 4   # f32 hidden chunk + xn + accumulator
        if weight_bytes + cand * per_row <= budget_bytes:
            return cand
    return 8


def _ffn_kernel(x_ref, gamma_ref, beta_ref, w1_ref, b1_ref, w2_ref, b2_ref,
                o_ref, *, eps, c_true, h_chunk, n_h_chunks):
    # ---- LayerNorm over the true feature dim (f32, VPU) ----
    # Padded feature columns of x are zero, so sums over the padded axis are
    # exact; E[x^2] - E[x]^2 keeps the padded columns out of the variance.
    x = x_ref[...].astype(jnp.float32)                       # (tm, Cp)
    inv_c = 1.0 / c_true
    mean = jnp.sum(x, axis=-1, keepdims=True) * inv_c
    var = jnp.sum(x * x, axis=-1, keepdims=True) * inv_c - mean * mean
    xn = (x - mean) * jax.lax.rsqrt(var + eps)
    # gamma/beta are zero-padded, so padded columns of xn become exactly 0
    # (and the padded rows of w1 are zero anyway — double safety).
    xn = xn * gamma_ref[...] + beta_ref[...]
    xn_lo = xn.astype(w1_ref.dtype)                          # bf16 MXU operand

    acc = jnp.zeros((x.shape[0], o_ref.shape[-1]), jnp.float32)
    for c in range(n_h_chunks):                              # static unroll
        lo = c * h_chunk
        hi = lo + h_chunk
        # ---- w_1 chunk: Linear C -> h_chunk (bf16 in, f32 accumulate) ----
        h = jnp.dot(xn_lo, w1_ref[:, lo:hi],
                    preferred_element_type=jnp.float32)
        h = h + b1_ref[:, lo:hi]
        # ---- Swish (f32 on VPU/EUP); dropout1 is identity in eval mode ----
        h = h * jax.nn.sigmoid(h)
        # ---- w_2 chunk: Linear h_chunk -> C (accumulate in f32) ----
        acc = acc + jnp.dot(h.astype(w2_ref.dtype), w2_ref[lo:hi, :],
                            preferred_element_type=jnp.float32)
    y = acc + b2_ref[...]
    # dropout2 is identity in eval mode
    o_ref[...] = y.astype(o_ref.dtype)


def streaming_ffn(x, gamma, beta, w1, b1, w2, b2, *, eps=1e-5, tm=None,
                  matmul_dtype=jnp.bfloat16,
                  vmem_budget_bytes=40 * 1024 * 1024):
    """x: (T, B, C).  w1: (C, H), b1: (H,), w2: (H, C), b2: (C,)."""
    T, B, C = x.shape
    H = w1.shape[1]
    N = T * B

    cp = _round_up(C, 128)        # lane-dense feature axis
    hp = _round_up(H, 128)        # lane-dense hidden axis
    h_chunk = _choose_h_chunk(hp)
    n_h_chunks = hp // h_chunk

    x_bytes = jnp.dtype(x.dtype).itemsize
    w_bytes = jnp.dtype(matmul_dtype).itemsize
    if tm is None:
        tm = _pick_tm(cp, hp, h_chunk, x_bytes, w_bytes, vmem_budget_bytes)
    tm = min(tm, _round_up(N, 8))
    np_rows = _round_up(N, tm)

    f32 = jnp.float32

    def pad2(a, rows, cols):
        r, c = a.shape
        return jnp.pad(a, ((0, rows - r), (0, cols - c)))

    x2d = pad2(x.reshape(N, C), np_rows, cp)
    gamma_p = pad2(gamma.astype(f32).reshape(1, C), 1, cp)
    beta_p = pad2(beta.astype(f32).reshape(1, C), 1, cp)
    w1_p = pad2(w1.astype(matmul_dtype), cp, hp)
    b1_p = pad2(b1.astype(f32).reshape(1, H), 1, hp)
    w2_p = pad2(w2.astype(matmul_dtype), hp, cp)
    b2_p = pad2(b2.astype(f32).reshape(1, C), 1, cp)

    kernel = functools.partial(_ffn_kernel, eps=eps, c_true=C,
                               h_chunk=h_chunk, n_h_chunks=n_h_chunks)

    cost = pl.CostEstimate(
        flops=4 * np_rows * cp * hp,
        transcendentals=np_rows * hp,
        bytes_accessed=(2 * np_rows * cp * x_bytes
                        + 2 * cp * hp * w_bytes
                        + (hp + 3 * cp) * 4),
    )

    def make_call(single_buffer_params):
        kw = {"pipeline_mode": pl.Buffered(1)} if single_buffer_params else {}

        def const_spec(shape):
            return pl.BlockSpec(shape, lambda i: (0, 0), **kw)

        return pl.pallas_call(
            kernel,
            out_shape=jax.ShapeDtypeStruct((np_rows, cp), x.dtype),
            grid_spec=pltpu.PrefetchScalarGridSpec(
                num_scalar_prefetch=0,
                grid=(np_rows // tm,),
                in_specs=[
                    pl.BlockSpec((tm, cp), lambda i: (i, 0)),   # x rows
                    const_spec((1, cp)),                        # gamma
                    const_spec((1, cp)),                        # beta
                    const_spec((cp, hp)),                       # w1 (in, hidden)
                    const_spec((1, hp)),                        # b1
                    const_spec((hp, cp)),                       # w2 (hidden, in)
                    const_spec((1, cp)),                        # b2
                ],
                out_specs=pl.BlockSpec((tm, cp), lambda i: (i, 0)),
            ),
            compiler_params=pltpu.CompilerParams(
                dimension_semantics=("parallel",),
                vmem_limit_bytes=48 * 1024 * 1024),
            cost_estimate=cost,
        )

    args = (x2d, gamma_p, beta_p, w1_p, b1_p, w2_p, b2_p)
    try:
        out2d = jax.block_until_ready(make_call(True)(*args))
    except Exception:
        # JAX version without pipeline_mode=pl.Buffered(1) support: fall back
        # to default (double-buffered) specs for the invariant operands.
        out2d = jax.block_until_ready(make_call(False)(*args))

    return out2d[:N, :C].reshape(T, B, C)


def reference_ffn(x, gamma, beta, w1, b1, w2, b2, eps=1e-5,
                  matmul_dtype=jnp.bfloat16):
    """Plain-JAX reference matching the PyTorch forward (eval mode), using the
    same bf16-operand / f32-accumulate matmul precision as the kernel."""
    xf = x.astype(jnp.float32)
    mean = jnp.mean(xf, axis=-1, keepdims=True)
    var = jnp.mean((xf - mean) ** 2, axis=-1, keepdims=True)
    xn = (xf - mean) * jax.lax.rsqrt(var + eps) * gamma + beta
    h = jnp.dot(xn.astype(matmul_dtype), w1.astype(matmul_dtype),
                preferred_element_type=jnp.float32) + b1
    h = h * jax.nn.sigmoid(h)
    y = jnp.dot(h.astype(matmul_dtype), w2.astype(matmul_dtype),
                preferred_element_type=jnp.float32) + b2
    return y.astype(x.dtype)


if __name__ == "__main__":
    key = jax.random.PRNGKey(0)

    # Small shapes consistent with the T x B x C module input; the second case
    # exercises the padding path (C, H, and row count not tile-aligned).
    for (T, B, C, H) in [(8, 2, 32, 64), (5, 3, 40, 96)]:
        key, kx, kg, kb, kw1, kb1, kw2, kb2 = jax.random.split(key, 8)
        x = jax.random.normal(kx, (T, B, C), dtype=jnp.float32)
        # torch.nn.Linear weight is (out, in); we store the transposed (in, out).
        gamma = 1.0 + 0.1 * jax.random.normal(kg, (C,), dtype=jnp.float32)
        beta = 0.1 * jax.random.normal(kb, (C,), dtype=jnp.float32)
        w1 = jax.random.normal(kw1, (C, H), dtype=jnp.float32) / jnp.sqrt(C)
        b1 = 0.1 * jax.random.normal(kb1, (H,), dtype=jnp.float32)
        w2 = jax.random.normal(kw2, (H, C), dtype=jnp.float32) / jnp.sqrt(H)
        b2 = 0.1 * jax.random.normal(kb2, (C,), dtype=jnp.float32)

        out = streaming_ffn(x, gamma, beta, w1, b1, w2, b2)
        out = jax.block_until_ready(out)

        ref = reference_ffn(x, gamma, beta, w1, b1, w2, b2)
        assert out.shape == (T, B, C)
        max_err = float(jnp.max(jnp.abs(out - ref)))
        assert jnp.allclose(out, ref, atol=2e-2, rtol=2e-2), (
            f"mismatch vs reference (max |err| = {max_err})")

    print("KERNEL_OK")
</pallas_src>

<mosaic_0001>
module attributes {stable_mosaic.version = 11 : i64} {
  func.func @_ffn_kernel(%arg0: i32, %arg1: memref<16x128xf32, #tpu.memory_space<vmem>>, %arg2: memref<1x128xf32, #tpu.memory_space<vmem>>, %arg3: memref<1x128xf32, #tpu.memory_space<vmem>>, %arg4: memref<128x128xbf16, #tpu.memory_space<vmem>>, %arg5: memref<1x128xf32, #tpu.memory_space<vmem>>, %arg6: memref<128x128xbf16, #tpu.memory_space<vmem>>, %arg7: memref<1x128xf32, #tpu.memory_space<vmem>>, %arg8: memref<16x128xf32, #tpu.memory_space<vmem>>) attributes {dimension_semantics = [#tpu.dimension_semantics<parallel>], iteration_bounds = array<i64: 1>, scalar_prefetch = 0 : i64, scratch_operands = 0 : i64, tpu.core_type = #tpu.core_type<tc>, window_params = [{transform_indices = @transform_0, window_bounds = array<i64: 16, 128>}, {pipeline_mode = #tpu.pipeline_mode<synchronous>, transform_indices = @transform_1, window_bounds = array<i64: 1, 128>}, {pipeline_mode = #tpu.pipeline_mode<synchronous>, transform_indices = @transform_2, window_bounds = array<i64: 1, 128>}, {pipeline_mode = #tpu.pipeline_mode<synchronous>, transform_indices = @transform_3, window_bounds = array<i64: 128, 128>}, {pipeline_mode = #tpu.pipeline_mode<synchronous>, transform_indices = @transform_4, window_bounds = array<i64: 1, 128>}, {pipeline_mode = #tpu.pipeline_mode<synchronous>, transform_indices = @transform_5, window_bounds = array<i64: 128, 128>}, {pipeline_mode = #tpu.pipeline_mode<synchronous>, transform_indices = @transform_6, window_bounds = array<i64: 1, 128>}, {transform_indices = @transform_7, window_bounds = array<i64: 16, 128>}]} {
    %c0 = arith.constant 0 : index
    %c0_0 = arith.constant 0 : index
    %0 = vector.load %arg1[%c0, %c0_0] : memref<16x128xf32, #tpu.memory_space<vmem>>, vector<16x128xf32>
    %cst = arith.constant dense<0.000000e+00> : vector<16xf32>
    %1 = vector.multi_reduction <add>, %0, %cst [1] : vector<16x128xf32> to vector<16xf32>
    %2 = vector.shape_cast %1 : vector<16xf32> to vector<16x1xf32>
    %cst_1 = arith.constant 3.125000e-02 : f32
    %3 = vector.broadcast %cst_1 : f32 to vector<16x1xf32>
    %4 = arith.mulf %2, %3 : vector<16x1xf32>
    %5 = arith.mulf %0, %0 : vector<16x128xf32>
    %cst_2 = arith.constant dense<0.000000e+00> : vector<16xf32>
    %6 = vector.multi_reduction <add>, %5, %cst_2 [1] : vector<16x128xf32> to vector<16xf32>
    %7 = vector.shape_cast %6 : vector<16xf32> to vector<16x1xf32>
    %cst_3 = arith.constant 3.125000e-02 : f32
    %8 = vector.broadcast %cst_3 : f32 to vector<16x1xf32>
    %9 = arith.mulf %7, %8 : vector<16x1xf32>
    %10 = arith.mulf %4, %4 : vector<16x1xf32>
    %11 = arith.subf %9, %10 : vector<16x1xf32>
    %12 = vector.broadcast %4 : vector<16x1xf32> to vector<16x128xf32>
    %13 = arith.subf %0, %12 : vector<16x128xf32>
    %cst_4 = arith.constant 9.99999974E-6 : f32
    %14 = vector.broadcast %cst_4 : f32 to vector<16x1xf32>
    %15 = arith.addf %11, %14 : vector<16x1xf32>
    %16 = math.rsqrt %15 : vector<16x1xf32>
    %17 = vector.broadcast %16 : vector<16x1xf32> to vector<16x128xf32>
    %18 = arith.mulf %13, %17 : vector<16x128xf32>
    %c0_5 = arith.constant 0 : index
    %c0_6 = arith.constant 0 : index
    %19 = vector.load %arg2[%c0_5, %c0_6] : memref<1x128xf32, #tpu.memory_space<vmem>>, vector<1x128xf32>
    %20 = vector.broadcast %19 : vector<1x128xf32> to vector<16x128xf32>
    %21 = arith.mulf %18, %20 : vector<16x128xf32>
    %c0_7 = arith.constant 0 : index
    %c0_8 = arith.constant 0 : index
    %22 = vector.load %arg3[%c0_7, %c0_8] : memref<1x128xf32, #tpu.memory_space<vmem>>, vector<1x128xf32>
    %23 = vector.broadcast %22 : vector<1x128xf32> to vector<16x128xf32>
    %24 = arith.addf %21, %23 : vector<16x128xf32>
    %25 = arith.truncf %24 : vector<16x128xf32> to vector<16x128xbf16>
    %cst_9 = arith.constant 0.000000e+00 : f32
    %26 = vector.broadcast %cst_9 : f32 to vector<16x128xf32>
    %c0_10 = arith.constant 0 : index
    %c0_11 = arith.constant 0 : index
    %27 = vector.load %arg4[%c0_10, %c0_11] : memref<128x128xbf16, #tpu.memory_space<vmem>>, vector<128x128xbf16>
    %cst_12 = arith.constant dense<0.000000e+00> : vector<16x128xf32>
    %28 = tpu.matmul %25, %27, %cst_12 {dimension_numbers = #tpu.dot_dimension_numbers<[1], [0], [0], [1], [0, 0, 1, 1], [], []>} : vector<16x128xbf16>, vector<128x128xbf16>, vector<16x128xf32> -> vector<16x128xf32>
    %c0_13 = arith.constant 0 : index
    %c0_14 = arith.constant 0 : index
    %29 = vector.load %arg5[%c0_13, %c0_14] : memref<1x128xf32, #tpu.memory_space<vmem>>, vector<1x128xf32>
    %30 = vector.broadcast %29 : vector<1x128xf32> to vector<16x128xf32>
    %31 = arith.addf %28, %30 : vector<16x128xf32>
    %32 = arith.negf %31 : vector<16x128xf32>
    %33 = math.exp %32 : vector<16x128xf32>
    %cst_15 = arith.constant 1.000000e+00 : f32
    %34 = vector.broadcast %cst_15 : f32 to vector<16x128xf32>
    %35 = arith.addf %34, %33 : vector<16x128xf32>
    %36 = arith.divf %34, %35 : vector<16x128xf32>
    %37 = arith.mulf %31, %36 : vector<16x128xf32>
    %38 = arith.truncf %37 : vector<16x128xf32> to vector<16x128xbf16>
    %c0_16 = arith.constant 0 : index
    %c0_17 = arith.constant 0 : index
    %39 = vector.load %arg6[%c0_16, %c0_17] : memref<128x128xbf16, #tpu.memory_space<vmem>>, vector<128x128xbf16>
    %cst_18 = arith.constant dense<0.000000e+00> : vector<16x128xf32>
    %40 = tpu.matmul %38, %39, %cst_18 {dimension_numbers = #tpu.dot_dimension_numbers<[1], [0], [0], [1], [0, 0, 1, 1], [], []>} : vector<16x128xbf16>, vector<128x128xbf16>, vector<16x128xf32> -> vector<16x128xf32>
    %41 = arith.addf %26, %40 : vector<16x128xf32>
    %c0_19 = arith.constant 0 : index
    %c0_20 = arith.constant 0 : index
    %42 = vector.load %arg7[%c0_19, %c0_20] : memref<1x128xf32, #tpu.memory_space<vmem>>, vector<1x128xf32>
    %43 = vector.broadcast %42 : vector<1x128xf32> to vector<16x128xf32>
    %44 = arith.addf %41, %43 : vector<16x128xf32>
    %c0_21 = arith.constant 0 : index
    %c0_22 = arith.constant 0 : index
    %45 = vector.load %arg8[%c0_21, %c0_22] : memref<16x128xf32, #tpu.memory_space<vmem>>, vector<16x128xf32>
    tpu.vector_store %arg8[%c0_21, %c0_22], %44 {strides = array<i32>} : memref<16x128xf32, #tpu.memory_space<vmem>>, vector<16x128xf32>,
    return
  }
  func.func @transform_0(%arg0: i32) -> (i32, i32) {
    %c0_i32 = arith.constant 0 : i32
    %c0_i32_0 = arith.constant 0 : i32
    return %arg0, %c0_i32 : i32, i32
  }
  func.func @transform_1(%arg0: i32) -> (i32, i32) {
    %c0_i32 = arith.constant 0 : i32
    %c0_i32_0 = arith.constant 0 : i32
    %c0_i32_1 = arith.constant 0 : i32
    return %c0_i32, %c0_i32_0 : i32, i32
  }
  func.func @transform_2(%arg0: i32) -> (i32, i32) {
    %c0_i32 = arith.constant 0 : i32
    %c0_i32_0 = arith.constant 0 : i32
    %c0_i32_1 = arith.constant 0 : i32
    return %c0_i32, %c0_i32_0 : i32, i32
  }
  func.func @transform_3(%arg0: i32) -> (i32, i32) {
    %c0_i32 = arith.constant 0 : i32
    %c0_i32_0 = arith.constant 0 : i32
    %c0_i32_1 = arith.constant 0 : i32
    return %c0_i32, %c0_i32_0 : i32, i32
  }
  func.func @transform_4(%arg0: i32) -> (i32, i32) {
    %c0_i32 = arith.constant 0 : i32
    %c0_i32_0 = arith.constant 0 : i32
    %c0_i32_1 = arith.constant 0 : i32
    return %c0_i32, %c0_i32_0 : i32, i32
  }
  func.func @transform_5(%arg0: i32) -> (i32, i32) {
    %c0_i32 = arith.constant 0 : i32
    %c0_i32_0 = arith.constant 0 : i32
    %c0_i32_1 = arith.constant 0 : i32
    return %c0_i32, %c0_i32_0 : i32, i32
  }
  func.func @transform_6(%arg0: i32) -> (i32, i32) {
    %c0_i32 = arith.constant 0 : i32
    %c0_i32_0 = arith.constant 0 : i32
    %c0_i32_1 = arith.constant 0 : i32
    return %c0_i32, %c0_i32_0 : i32, i32
  }
  func.func @transform_7(%arg0: i32) -> (i32, i32) {
    %c0_i32 = arith.constant 0 : i32
    %c0_i32_0 = arith.constant 0 : i32
    return %arg0, %c0_i32 : i32, i32
  }
}

module attributes {stable_mosaic.version = 11 : i64} {
  func.func @_ffn_kernel(%arg0: i32, %arg1: memref<16x128xf32, #tpu.memory_space<vmem>>, %arg2: memref<1x128xf32, #tpu.memory_space<vmem>>, %arg3: memref<1x128xf32, #tpu.memory_space<vmem>>, %arg4: memref<128x128xbf16, #tpu.memory_space<vmem>>, %arg5: memref<1x128xf32, #tpu.memory_space<vmem>>, %arg6: memref<128x128xbf16, #tpu.memory_space<vmem>>, %arg7: memref<1x128xf32, #tpu.memory_space<vmem>>, %arg8: memref<16x128xf32, #tpu.memory_space<vmem>>) attributes {dimension_semantics = [#tpu.dimension_semantics<parallel>], iteration_bounds = array<i64: 1>, scalar_prefetch = 0 : i64, scratch_operands = 0 : i64, tpu.core_type = #tpu.core_type<tc>, window_params = [{transform_indices = @transform_0, window_bounds = array<i64: 16, 128>}, {pipeline_mode = #tpu.pipeline_mode<synchronous>, transform_indices = @transform_1, window_bounds = array<i64: 1, 128>}, {pipeline_mode = #tpu.pipeline_mode<synchronous>, transform_indices = @transform_2, window_bounds = array<i64: 1, 128>}, {pipeline_mode = #tpu.pipeline_mode<synchronous>, transform_indices = @transform_3, window_bounds = array<i64: 128, 128>}, {pipeline_mode = #tpu.pipeline_mode<synchronous>, transform_indices = @transform_4, window_bounds = array<i64: 1, 128>}, {pipeline_mode = #tpu.pipeline_mode<synchronous>, transform_indices = @transform_5, window_bounds = array<i64: 128, 128>}, {pipeline_mode = #tpu.pipeline_mode<synchronous>, transform_indices = @transform_6, window_bounds = array<i64: 1, 128>}, {transform_indices = @transform_7, window_bounds = array<i64: 16, 128>}]} {
    %c0 = arith.constant 0 : index
    %c0_0 = arith.constant 0 : index
    %0 = vector.load %arg1[%c0, %c0_0] : memref<16x128xf32, #tpu.memory_space<vmem>>, vector<16x128xf32>
    %cst = arith.constant dense<0.000000e+00> : vector<16xf32>
    %1 = vector.multi_reduction <add>, %0, %cst [1] : vector<16x128xf32> to vector<16xf32>
    %2 = vector.shape_cast %1 : vector<16xf32> to vector<16x1xf32>
    %cst_1 = arith.constant 3.125000e-02 : f32
    %3 = vector.broadcast %cst_1 : f32 to vector<16x1xf32>
    %4 = arith.mulf %2, %3 : vector<16x1xf32>
    %5 = arith.mulf %0, %0 : vector<16x128xf32>
    %cst_2 = arith.constant dense<0.000000e+00> : vector<16xf32>
    %6 = vector.multi_reduction <add>, %5, %cst_2 [1] : vector<16x128xf32> to vector<16xf32>
    %7 = vector.shape_cast %6 : vector<16xf32> to vector<16x1xf32>
    %cst_3 = arith.constant 3.125000e-02 : f32
    %8 = vector.broadcast %cst_3 : f32 to vector<16x1xf32>
    %9 = arith.mulf %7, %8 : vector<16x1xf32>
    %10 = arith.mulf %4, %4 : vector<16x1xf32>
    %11 = arith.subf %9, %10 : vector<16x1xf32>
    %12 = vector.broadcast %4 : vector<16x1xf32> to vector<16x128xf32>
    %13 = arith.subf %0, %12 : vector<16x128xf32>
    %cst_4 = arith.constant 9.99999974E-6 : f32
    %14 = vector.broadcast %cst_4 : f32 to vector<16x1xf32>
    %15 = arith.addf %11, %14 : vector<16x1xf32>
    %16 = math.rsqrt %15 : vector<16x1xf32>
    %17 = vector.broadcast %16 : vector<16x1xf32> to vector<16x128xf32>
    %18 = arith.mulf %13, %17 : vector<16x128xf32>
    %c0_5 = arith.constant 0 : index
    %c0_6 = arith.constant 0 : index
    %19 = vector.load %arg2[%c0_5, %c0_6] : memref<1x128xf32, #tpu.memory_space<vmem>>, vector<1x128xf32>
    %20 = vector.broadcast %19 : vector<1x128xf32> to vector<16x128xf32>
    %21 = arith.mulf %18, %20 : vector<16x128xf32>
    %c0_7 = arith.constant 0 : index
    %c0_8 = arith.constant 0 : index
    %22 = vector.load %arg3[%c0_7, %c0_8] : memref<1x128xf32, #tpu.memory_space<vmem>>, vector<1x128xf32>
    %23 = vector.broadcast %22 : vector<1x128xf32> to vector<16x128xf32>
    %24 = arith.addf %21, %23 : vector<16x128xf32>
    %25 = arith.truncf %24 : vector<16x128xf32> to vector<16x128xbf16>
    %cst_9 = arith.constant 0.000000e+00 : f32
    %26 = vector.broadcast %cst_9 : f32 to vector<16x128xf32>
    %c0_10 = arith.constant 0 : index
    %c0_11 = arith.constant 0 : index
    %27 = vector.load %arg4[%c0_10, %c0_11] : memref<128x128xbf16, #tpu.memory_space<vmem>>, vector<128x128xbf16>
    %cst_12 = arith.constant dense<0.000000e+00> : vector<16x128xf32>
    %28 = tpu.matmul %25, %27, %cst_12 {dimension_numbers = #tpu.dot_dimension_numbers<[1], [0], [0], [1], [0, 0, 1, 1], [], []>} : vector<16x128xbf16>, vector<128x128xbf16>, vector<16x128xf32> -> vector<16x128xf32>
    %c0_13 = arith.constant 0 : index
    %c0_14 = arith.constant 0 : index
    %29 = vector.load %arg5[%c0_13, %c0_14] : memref<1x128xf32, #tpu.memory_space<vmem>>, vector<1x128xf32>
    %30 = vector.broadcast %29 : vector<1x128xf32> to vector<16x128xf32>
    %31 = arith.addf %28, %30 : vector<16x128xf32>
    %32 = arith.negf %31 : vector<16x128xf32>
    %33 = math.exp %32 : vector<16x128xf32>
    %cst_15 = arith.constant 1.000000e+00 : f32
    %34 = vector.broadcast %cst_15 : f32 to vector<16x128xf32>
    %35 = arith.addf %34, %33 : vector<16x128xf32>
    %36 = arith.divf %34, %35 : vector<16x128xf32>
    %37 = arith.mulf %31, %36 : vector<16x128xf32>
    %38 = arith.truncf %37 : vector<16x128xf32> to vector<16x128xbf16>
    %c0_16 = arith.constant 0 : index
    %c0_17 = arith.constant 0 : index
    %39 = vector.load %arg6[%c0_16, %c0_17] : memref<128x128xbf16, #tpu.memory_space<vmem>>, vector<128x128xbf16>
    %cst_18 = arith.constant dense<0.000000e+00> : vector<16x128xf32>
    %40 = tpu.matmul %38, %39, %cst_18 {dimension_numbers = #tpu.dot_dimension_numbers<[1], [0], [0], [1], [0, 0, 1, 1], [], []>} : vector<16x128xbf16>, vector<128x128xbf16>, vector<16x128xf32> -> vector<16x128xf32>
    %41 = arith.addf %26, %40 : vector<16x128xf32>
    %c0_19 = arith.constant 0 : index
    %c0_20 = arith.constant 0 : index
    %42 = vector.load %arg7[%c0_19, %c0_20] : memref<1x128xf32, #tpu.memory_space<vmem>>, vector<1x128xf32>
    %43 = vector.broadcast %42 : vector<1x128xf32> to vector<16x128xf32>
    %44 = arith.addf %41, %43 : vector<16x128xf32>
    %c0_21 = arith.constant 0 : index
    %c0_22 = arith.constant 0 : index
    %45 = vector.load %arg8[%c0_21, %c0_22] : memref<16x128xf32, #tpu.memory_space<vmem>>, vector<16x128xf32>
    tpu.vector_store %arg8[%c0_21, %c0_22], %44 {strides = array<i32>} : memref<16x128xf32, #tpu.memory_space<vmem>>, vector<16x128xf32>,
    return
  }
  func.func @transform_0(%arg0: i32) -> (i32, i32) {
    %c0_i32 = arith.constant 0 : i32
    %c0_i32_0 = arith.constant 0 : i32
    return %arg0, %c0_i32 : i32, i32
  }
  func.func @transform_1(%arg0: i32) -> (i32, i32) {
    %c0_i32 = arith.constant 0 : i32
    %c0_i32_0 = arith.constant 0 : i32
    %c0_i32_1 = arith.constant 0 : i32
    return %c0_i32, %c0_i32_0 : i32, i32
  }
  func.func @transform_2(%arg0: i32) -> (i32, i32) {
    %c0_i32 = arith.constant 0 : i32
    %c0_i32_0 = arith.constant 0 : i32
    %c0_i32_1 = arith.constant 0 : i32
    return %c0_i32, %c0_i32_0 : i32, i32
  }
  func.func @transform_3(%arg0: i32) -> (i32, i32) {
    %c0_i32 = arith.constant 0 : i32
    %c0_i32_0 = arith.constant 0 : i32
    %c0_i32_1 = arith.constant 0 : i32
    return %c0_i32, %c0_i32_0 : i32, i32
  }
  func.func @transform_4(%arg0: i32) -> (i32, i32) {
    %c0_i32 = arith.constant 0 : i32
    %c0_i32_0 = arith.constant 0 : i32
    %c0_i32_1 = arith.constant 0 : i32
    return %c0_i32, %c0_i32_0 : i32, i32
  }
  func.func @transform_5(%arg0: i32) -> (i32, i32) {
    %c0_i32 = arith.constant 0 : i32
    %c0_i32_0 = arith.constant 0 : i32
    %c0_i32_1 = arith.constant 0 : i32
    return %c0_i32, %c0_i32_0 : i32, i32
  }
  func.func @transform_6(%arg0: i32) -> (i32, i32) {
    %c0_i32 = arith.constant 0 : i32
    %c0_i32_0 = arith.constant 0 : i32
    %c0_i32_1 = arith.constant 0 : i32
    return %c0_i32, %c0_i32_0 : i32, i32
  }
  func.func @transform_7(%arg0: i32) -> (i32, i32) {
    %c0_i32 = arith.constant 0 : i32
    %c0_i32_0 = arith.constant 0 : i32
    return %arg0, %c0_i32 : i32, i32
  }
}

</mosaic_0001>

<llo_original>
// kernel: tpu_custom_call.1
$region0: #{tpu_custom_call.1}
  #allocation0 [shape = 'u32[]', space=smem, size = 0x4, offset = 0x4, fixed_abs, tag = 'smem constant byte address 0x4 - core index']
  #allocation1 [shape = 'u32[144,128]{1,0:T(1,128)}', space=vmem, size = 0x12000, scoped, tag = 'internal scratch']
  %s0 = inlined_call_operand.hbm [shape: f32[16,128], index: 0, kind: input, shape index: {}]
  %s1 = inlined_call_operand.vmem [shape: f32[1,128], index: 1, kind: input, shape index: {}]
  %s2 = inlined_call_operand.vmem [shape: f32[1,128], index: 2, kind: input, shape index: {}]
  %s3 = inlined_call_operand.hbm [shape: bf16[128,128], index: 3, kind: input, shape index: {}]
  %s4 = inlined_call_operand.vmem [shape: f32[1,128], index: 4, kind: input, shape index: {}]
  %s5 = inlined_call_operand.hbm [shape: bf16[128,128], index: 5, kind: input, shape index: {}]
  %s6 = inlined_call_operand.vmem [shape: f32[1,128], index: 6, kind: input, shape index: {}]
  %s7 = inlined_call_operand.hbm [shape: f32[16,128], index: 7, kind: output, shape index: {}]
  %s8 = sld [smem:[#allocation0]]
  $region50: #{tpu_custom_call.1} parent=0
    _
  %s10 = ssub.s32 1, %s8
  %s11 = scalar_select 0, %s10, %s8
  $region1: #{tpu_custom_call.1} parent=0
    #allocation2 [shape = 'u8[8192]{0}', space=vmem, size = 0x2000, scoped, tag = 'input window, operand 0, single buffered']
    #allocation3 [shape = 's32[1]{0}', space=sflag, size = 0x4, scoped, tag = 'scoped memory for tpu_custom_call.1']
    #allocation4 [shape = 's32[1]{0}', space=sflag, size = 0x4, scoped, tag = 'scoped memory for tpu_custom_call.1']
    #allocation5 [shape = 'u8[32768]{0}', space=vmem, size = 0x8000, scoped, tag = 'input window, operand 3, single buffered']
    #allocation6 [shape = 's32[1]{0}', space=sflag, size = 0x4, scoped, tag = 'scoped memory for tpu_custom_call.1']
    #allocation7 [shape = 'u8[32768]{0}', space=vmem, size = 0x8000, scoped, tag = 'input window, operand 5, single buffered']
    #allocation8 [shape = 'u8[8192]{0}', space=vmem, size = 0x2000, scoped, tag = 'output window, operand 0, single buffered']
    %12 = vsyncpa [#allocation3], 0
    %13 = vsyncpa [#allocation6], 0
    %14 = vsyncpa [#allocation4], 0
    // Predicated region
    $region2: #{tpu_custom_call.1} parent=1 // pred_check
      _
    $region3: #{tpu_custom_call.1} parent=1 // pred_check_branch
      %16 = sbr.rel (0) target = $region5
    $region4: #{tpu_custom_call.1} parent=1 // pred_region
      %s18 = ssub.s32 256, 256
      %19 = vsyncadd [#allocation3], %s18
      %s20 = sshll.u32 [#allocation2], 4
      %s21 = int_to_ptr.vmem [resolvable:$true] %s20
      %26 = dma.hbm_to_vmem [thread:$0]  %s0, 256, %s21, [#allocation3], 128, 128, 8
    $region5: #{tpu_custom_call.1} parent=1 // pred_fallthru
      _
    // Predicated region
    $region6: #{tpu_custom_call.1} parent=1 // pred_check
      _
    $region7: #{tpu_custom_call.1} parent=1 // pred_check_branch
      %28 = sbr.rel (0) target = $region9
    $region8: #{tpu_custom_call.1} parent=1 // pred_region
      _
    $region9: #{tpu_custom_call.1} parent=1 // pred_fallthru
      _
    // Predicated region
    $region10: #{tpu_custom_call.1} parent=1 // pred_check
      _
    $region11: #{tpu_custom_call.1} parent=1 // pred_check_branch
      %30 = sbr.rel (0) target = $region13
    $region12: #{tpu_custom_call.1} parent=1 // pred_region
      _
    $region13: #{tpu_custom_call.1} parent=1 // pred_fallthru
      _
    // Predicated region
    $region14: #{tpu_custom_call.1} parent=1 // pred_check
      _
    $region15: #{tpu_custom_call.1} parent=1 // pred_check_branch
      %32 = sbr.rel (0) target = $region17
    $region16: #{tpu_custom_call.1} parent=1 // pred_region
      %s34 = ssub.s32 1024, 1024
      %35 = vsyncadd [#allocation6], %s34
      %s36 = sshll.u32 [#allocation5], 4
      %s37 = int_to_ptr.vmem [resolvable:$true] %s36
      %42 = dma.hbm_to_vmem [thread:$0]  %s3, 1024, %s37, [#allocation6], 64, 64, 4
    $region17: #{tpu_custom_call.1} parent=1 // pred_fallthru
      _
    // Predicated region
    $region18: #{tpu_custom_call.1} parent=1 // pred_check
      _
    $region19: #{tpu_custom_call.1} parent=1 // pred_check_branch
      %44 = sbr.rel (0) target = $region21
    $region20: #{tpu_custom_call.1} parent=1 // pred_region
      _
    $region21: #{tpu_custom_call.1} parent=1 // pred_fallthru
      _
    // Predicated region
    $region22: #{tpu_custom_call.1} parent=1 // pred_check
      _
    $region23: #{tpu_custom_call.1} parent=1 // pred_check_branch
      %46 = sbr.rel (0) target = $region25
    $region24: #{tpu_custom_call.1} parent=1 // pred_region
      %s48 = ssub.s32 1024, 1024
      %49 = vsyncadd [#allocation6], %s48
      %s50 = sshll.u32 [#allocation7], 4
      %s51 = int_to_ptr.vmem [resolvable:$true] %s50
      %56 = dma.hbm_to_vmem [thread:$0]  %s5, 1024, %s51, [#allocation6], 64, 64, 4
    $region25: #{tpu_custom_call.1} parent=1 // pred_fallthru
      _
    // Predicated region
    $region26: #{tpu_custom_call.1} parent=1 // pred_check
      _
    $region27: #{tpu_custom_call.1} parent=1 // pred_check_branch
      %58 = sbr.rel (0) target = $region29
    $region28: #{tpu_custom_call.1} parent=1 // pred_region
      _
    $region29: #{tpu_custom_call.1} parent=1 // pred_fallthru
      _
    // Predicated region
    $region30: #{tpu_custom_call.1} parent=1 // pred_check
      _
    $region31: #{tpu_custom_call.1} parent=1 // pred_check_branch
      %60 = sbr.rel (0) target = $region33
    $region32: #{tpu_custom_call.1} parent=1 // pred_region
      %61 = dma.done [#allocation3], 256
    $region33: #{tpu_custom_call.1} parent=1 // pred_fallthru
      _
    // Predicated region
    $region34: #{tpu_custom_call.1} parent=1 // pred_check
      _
    $region35: #{tpu_custom_call.1} parent=1 // pred_check_branch
      %63 = sbr.rel (0) target = $region37
    $region36: #{tpu_custom_call.1} parent=1 // pred_region
      %64 = dma.done [#allocation6], 1024
    $region37: #{tpu_custom_call.1} parent=1 // pred_fallthru
      _
    // Predicated region
    $region38: #{tpu_custom_call.1} parent=1 // pred_check
      _
    $region39: #{tpu_custom_call.1} parent=1 // pred_check_branch
      %66 = sbr.rel (0) target = $region41
    $region40: #{tpu_custom_call.1} parent=1 // pred_region
      %67 = dma.done [#allocation6], 1024
    $region41: #{tpu_custom_call.1} parent=1 // pred_fallthru
      _
    %v69 = vld [vmem:[#allocation2] sm:$0xff]
    %v70 = vld [vmem:[#allocation2 + $0x8] sm:$0xff]
    %71 = vadd.xlane.f32.xlu0 %v69
    %v72 = vpop.xlane.xlu0 %71
    %73 = vadd.xlane.f32.xlu0 %v70
    %v74 = vpop.xlane.xlu0 %73
    %v75 = vmul.f32 %v72, 0.03125
    %v76 = vmul.f32 %v74, 0.03125
    %v77 = vmul.f32 %v69, %v69
    %v78 = vmul.f32 %v70, %v70
    %79 = vadd.xlane.f32.xlu0 %v77
    %v80 = vpop.xlane.xlu0 %79
    %81 = vadd.xlane.f32.xlu0 %v78
    %v82 = vpop.xlane.xlu0 %81
    %v83 = vmul.f32 %v80, 0.03125
    %v84 = vmul.f32 %v82, 0.03125
    %v85 = vmul.f32 %v75, %v75
    %v86 = vmul.f32 %v76, %v76
    %v87 = vsub.f32 %v83, %v85
    %v88 = vsub.f32 %v84, %v86
    %v89 = vsub.f32 %v69, %v75
    %v90 = vsub.f32 %v70, %v76
    %v91 = vadd.f32 %v87, 1e-05
    %v92 = vadd.f32 %v88, 1e-05
    %v93 = vrsqrt.pop %v91
    %v94 = vrsqrt.pop %v92
    %v95 = vmul.f32 %v89, %v93
    %v96 = vmul.f32 %v90, %v94
    %v97 = vld [vmem:[%s1] sm:$0x1]
    %v99 = vlaneseq
    %v100 = vshrl.u32 %v99, 7
    %v101 = vsub.s32 0, %v100
    %v102 = vrot.slane %v97, %v101
    %v104 = vmul.f32 %v95, %v102
    %v105 = vmul.f32 %v96, %v102
    %v106 = vld [vmem:[%s2] sm:$0x1]
    %v108 = vlaneseq
    %v109 = vshrl.u32 %v108, 7
    %v110 = vsub.s32 0, %v109
    %v111 = vrot.slane %v106, %v110
    %v113 = vadd.f32 %v104, %v111
    %v114 = vadd.f32 %v105, %v111
    %v115 = vpack.c.bf16 %v114, %v113
    %v116 = vld [vmem:[#allocation5] sm:$0xf]
    %v117 = vld [vmem:[#allocation5 + $0x4] sm:$0xf]
    %v118 = vld [vmem:[#allocation5 + $0x8] sm:$0xf]
    %v119 = vld [vmem:[#allocation5 + $0xc] sm:$0xf]
    %v120 = vld [vmem:[#allocation5 + $0x10] sm:$0xf]
    %v121 = vld [vmem:[#allocation5 + $0x14] sm:$0xf]
    %v122 = vld [vmem:[#allocation5 + $0x18] sm:$0xf]
    %v123 = vld [vmem:[#allocation5 + $0x1c] sm:$0xf]
    %v124 = vld [vmem:[#allocation5 + $0x20] sm:$0xf]
    %v125 = vld [vmem:[#allocation5 + $0x24] sm:$0xf]
    %v126 = vld [vmem:[#allocation5 + $0x28] sm:$0xf]
    %v127 = vld [vmem:[#allocation5 + $0x2c] sm:$0xf]
    %v128 = vld [vmem:[#allocation5 + $0x30] sm:$0xf]
    %v129 = vld [vmem:[#allocation5 + $0x34] sm:$0xf]
    %v130 = vld [vmem:[#allocation5 + $0x38] sm:$0xf]
    %v131 = vld [vmem:[#allocation5 + $0x3c] sm:$0xf]
    %v132 = vld [vmem:[%s4] sm:$0x1]
    %v134 = vlaneseq
    %v135 = vshrl.u32 %v134, 7
    %v136 = vsub.s32 0, %v135
    %v137 = vrot.slane %v132, %v136
    %v155 = vunpack.c.l.b16 %v116
    %v156 = vunpack.c.l.b16 %v117
    %v157 = vunpack.c.l.b16 %v118
    %v158 = vunpack.c.l.b16 %v119
    %v159 = vunpack.c.l.b16 %v120
    %v160 = vunpack.c.l.b16 %v121
    %v161 = vunpack.c.l.b16 %v122
    %v162 = vunpack.c.l.b16 %v123
    %v163 = vunpack.c.l.b16 %v124
    %v164 = vunpack.c.l.b16 %v125
    %v165 = vunpack.c.l.b16 %v126
    %v166 = vunpack.c.l.b16 %v127
    %v167 = vunpack.c.l.b16 %v128
    %v168 = vunpack.c.l.b16 %v129
    %v169 = vunpack.c.l.b16 %v130
    %v170 = vunpack.c.l.b16 %v131
    %v171 = vpack.c.b16 %v156, %v155
    %v172 = vpack.c.b16 %v158, %v157
    %v173 = vpack.c.b16 %v160, %v159
    %v174 = vpack.c.b16 %v162, %v161
    %v175 = vpack.c.b16 %v164, %v163
    %v176 = vpack.c.b16 %v166, %v165
    %v177 = vpack.c.b16 %v168, %v167
    %v178 = vpack.c.b16 %v170, %v169
    %187 = vmatprep.subr.bf16.mxu0 0
    %188 = vmatpush1.bf16.msra.mxu0 %v178
    %189 = vmatprep.subr.bf16.mxu0 0
    %190 = vmatpush1.bf16.msra.mxu0 %v177
    %191 = vmatprep.subr.bf16.mxu0 0
    %192 = vmatpush1.bf16.msra.mxu0 %v176
    %193 = vmatprep.subr.bf16.mxu0 0
    %194 = vmatpush1.bf16.msra.mxu0 %v175
    %195 = vmatprep.subr.bf16.mxu0 0
    %196 = vmatpush1.bf16.msra.mxu0 %v174
    %197 = vmatprep.subr.bf16.mxu0 0
    %198 = vmatpush1.bf16.msra.mxu0 %v173
    %199 = vmatprep.subr.bf16.mxu0 0
    %200 = vmatpush1.bf16.msra.mxu0 %v172
    %201 = vmatprep.subr.bf16.mxu0 0
    %202 = vmatpush1.bf16.msra.mxu0 %v171
    %203 = vmatprep.subr.bf16.mxu0 0
    %204 = vmatpush2.bf16.msra.mxu0 0
    %205 = vmatprep.subr.bf16.mxu0 0
    %206 = vmatpush2.bf16.msra.mxu0 0
    %207 = vmatprep.subr.bf16.mxu0 0
    %208 = vmatpush2.bf16.msra.mxu0 0
    %209 = vmatprep.subr.bf16.mxu0 0
    %210 = vmatpush2.bf16.msra.mxu0 0
    %211 = vmatprep.subr.bf16.mxu0 0
    %212 = vmatpush2.bf16.msra.mxu0 0
    %213 = vmatprep.subr.bf16.mxu0 0
    %214 = vmatpush2.bf16.msra.mxu0 0
    %215 = vmatprep.subr.bf16.mxu0 0
    %216 = vmatpush2.bf16.msra.mxu0 0
    %217 = vmatprep.subr.bf16.mxu0 0
    %218 = vmatpush2.bf16.msra.mxu0 0
    %219 = vmatprep.mubr.bf16.mxu0 0
    %220 = vmatmul.mubr.bf16.gmra.mxu0 %v115
    %v221 = vpop.f32.mrf.mxu0
    %v222 = vadd.f32 %v137, %v221
    %v223 = vpop.f32.mrf.mxu0
    %v224 = vpop.f32.mrf.mxu0
    %v225 = vadd.f32 %v137, %v224
    %v226 = vpop.f32.mrf.mxu0
    %227 = vdwg.mxu0
    %v228 = vxor.u32 %v222, 2147483648
    %v229 = vxor.u32 %v225, 2147483648
    %v230 = vmul.f32 %v228, 1.442695
    %v231 = vpow.pop %v230
    %v232 = vmul.f32 %v229, 1.442695
    %v233 = vpow.pop %v232
    %v234 = vadd.f32 %v231, 1.0
    %v235 = vadd.f32 %v233, 1.0
    %v236 = vrcp.pop %v234
    %v237 = vmul.f32 1.0, %v236
    %v238 = vrcp.pop %v235
    %v239 = vmul.f32 1.0, %v238
    %v240 = vmul.f32 %v222, %v237
    %v241 = vmul.f32 %v225, %v239
    %v242 = vpack.c.bf16 %v241, %v240
    %v243 = vld [vmem:[#allocation7] sm:$0xf]
    %v244 = vld [vmem:[#allocation7 + $0x4] sm:$0xf]
    %v245 = vld [vmem:[#allocation7 + $0x8] sm:$0xf]
    %v246 = vld [vmem:[#allocation7 + $0xc] sm:$0xf]
    %v247 = vld [vmem:[#allocation7 + $0x10] sm:$0xf]
    %v248 = vld [vmem:[#allocation7 + $0x14] sm:$0xf]
    %v249 = vld [vmem:[#allocation7 + $0x18] sm:$0xf]
    %v250 = vld [vmem:[#allocation7 + $0x1c] sm:$0xf]
    %v251 = vld [vmem:[#allocation7 + $0x20] sm:$0xf]
    %v252 = vld [vmem:[#allocation7 + $0x24] sm:$0xf]
    %v253 = vld [vmem:[#allocation7 + $0x28] sm:$0xf]
    %v254 = vld [vmem:[#allocation7 + $0x2c] sm:$0xf]
    %v255 = vld [vmem:[#allocation7 + $0x30] sm:$0xf]
    %v256 = vld [vmem:[#allocation7 + $0x34] sm:$0xf]
    %v257 = vld [vmem:[#allocation7 + $0x38] sm:$0xf]
    %v258 = vld [vmem:[#allocation7 + $0x3c] sm:$0xf]
    %v259 = vld [vmem:[%s6] sm:$0x1]
    %v261 = vlaneseq
    %v262 = vshrl.u32 %v261, 7
    %v263 = vsub.s32 0, %v262
    %v264 = vrot.slane %v259, %v263
    %v282 = vunpack.c.l.b16 %v243
    %v283 = vunpack.c.l.b16 %v244
    %v284 = vunpack.c.l.b16 %v245
    %v285 = vunpack.c.l.b16 %v246
    %v286 = vunpack.c.l.b16 %v247
    %v287 = vunpack.c.l.b16 %v248
    %v288 = vunpack.c.l.b16 %v249
    %v289 = vunpack.c.l.b16 %v250
    %v290 = vunpack.c.l.b16 %v251
    %v291 = vunpack.c.l.b16 %v252
    %v292 = vunpack.c.l.b16 %v253
    %v293 = vunpack.c.l.b16 %v254
    %v294 = vunpack.c.l.b16 %v255
    %v295 = vunpack.c.l.b16 %v256
    %v296 = vunpack.c.l.b16 %v257
    %v297 = vunpack.c.l.b16 %v258
    %v298 = vpack.c.b16 %v283, %v282
    %v299 = vpack.c.b16 %v285, %v284
    %v300 = vpack.c.b16 %v287, %v286
    %v301 = vpack.c.b16 %v289, %v288
    %v302 = vpack.c.b16 %v291, %v290
    %v303 = vpack.c.b16 %v293, %v292
    %v304 = vpack.c.b16 %v295, %v294
    %v305 = vpack.c.b16 %v297, %v296
    %314 = vmatprep.subr.bf16.mxu0 0
    %315 = vmatpush1.bf16.msra.mxu0 %v305
    %316 = vmatprep.subr.bf16.mxu0 0
    %317 = vmatpush1.bf16.msra.mxu0 %v304
    %318 = vmatprep.subr.bf16.mxu0 0
    %319 = vmatpush1.bf16.msra.mxu0 %v303
    %320 = vmatprep.subr.bf16.mxu0 0
    %321 = vmatpush1.bf16.msra.mxu0 %v302
    %322 = vmatprep.subr.bf16.mxu0 0
    %323 = vmatpush1.bf16.msra.mxu0 %v301
    %324 = vmatprep.subr.bf16.mxu0 0
    %325 = vmatpush1.bf16.msra.mxu0 %v300
    %326 = vmatprep.subr.bf16.mxu0 0
    %327 = vmatpush1.bf16.msra.mxu0 %v299
    %328 = vmatprep.subr.bf16.mxu0 0
    %329 = vmatpush1.bf16.msra.mxu0 %v298
    %330 = vmatprep.subr.bf16.mxu0 0
    %331 = vmatpush2.bf16.msra.mxu0 0
    %332 = vmatprep.subr.bf16.mxu0 0
    %333 = vmatpush2.bf16.msra.mxu0 0
    %334 = vmatprep.subr.bf16.mxu0 0
    %335 = vmatpush2.bf16.msra.mxu0 0
    %336 = vmatprep.subr.bf16.mxu0 0
    %337 = vmatpush2.bf16.msra.mxu0 0
    %338 = vmatprep.subr.bf16.mxu0 0
    %339 = vmatpush2.bf16.msra.mxu0 0
    %340 = vmatprep.subr.bf16.mxu0 0
    %341 = vmatpush2.bf16.msra.mxu0 0
    %342 = vmatprep.subr.bf16.mxu0 0
    %343 = vmatpush2.bf16.msra.mxu0 0
    %344 = vmatprep.subr.bf16.mxu0 0
    %345 = vmatpush2.bf16.msra.mxu0 0
    %346 = vmatprep.mubr.bf16.mxu0 0
    %347 = vmatmul.mubr.bf16.gmra.mxu0 %v242
    %v348 = vpop.f32.mrf.mxu0
    %v349 = vadd.f32 %v264, %v348
    %v350 = vpop.f32.mrf.mxu0
    %v351 = vpop.f32.mrf.mxu0
    %v352 = vadd.f32 %v264, %v351
    %v353 = vpop.f32.mrf.mxu0
    %354 = vdwg.mxu0
    %355 = vst [vmem:[#allocation8] sm:$0xff] %v349
    %356 = vst [vmem:[#allocation8 + $0x8] sm:$0xff] %v352
    // Predicated region
    $region42: #{tpu_custom_call.1} parent=1 // pred_check
      _
    $region43: #{tpu_custom_call.1} parent=1 // pred_check_branch
      %358 = sbr.rel (0) target = $region45
    $region44: #{tpu_custom_call.1} parent=1 // pred_region
      %s360 = ssub.s32 256, 256
      %361 = vsyncadd [#allocation4], %s360
      %s362 = sshll.u32 [#allocation8], 4
      %s363 = int_to_ptr.vmem [resolvable:$true] %s362
      %368 = dma.vmem_to_hbm [thread:$0]  %s363, 256, %s7, [#allocation4], 128, 128, 8
    $region45: #{tpu_custom_call.1} parent=1 // pred_fallthru
      _
    // Predicated region
    $region46: #{tpu_custom_call.1} parent=1 // pred_check
      _
    $region47: #{tpu_custom_call.1} parent=1 // pred_check_branch
      %370 = sbr.rel (0) target = $region49
    $region48: #{tpu_custom_call.1} parent=1 // pred_region
      %371 = dma.done [#allocation4], 256
    $region49: #{tpu_custom_call.1} parent=1 // pred_fallthru
      _
    %372 = vsyncpa [#allocation3], 1
    %373 = vsyncpa [#allocation6], 1
    %374 = vsyncpa [#allocation4], 1

// kernel: tpu_custom_call.1
$region0: #{tpu_custom_call.1}
  #allocation0 [shape = 'u32[]', space=smem, size = 0x4, offset = 0x4, fixed_abs, tag = 'smem constant byte address 0x4 - core index']
  #allocation1 [shape = 'u32[144,128]{1,0:T(1,128)}', space=vmem, size = 0x12000, scoped, tag = 'internal scratch']
  %s0 = inlined_call_operand.hbm [shape: f32[16,128], index: 0, kind: input, shape index: {}]
  %s1 = inlined_call_operand.vmem [shape: f32[1,128], index: 1, kind: input, shape index: {}]
  %s2 = inlined_call_operand.vmem [shape: f32[1,128], index: 2, kind: input, shape index: {}]
  %s3 = inlined_call_operand.hbm [shape: bf16[128,128], index: 3, kind: input, shape index: {}]
  %s4 = inlined_call_operand.vmem [shape: f32[1,128], index: 4, kind: input, shape index: {}]
  %s5 = inlined_call_operand.hbm [shape: bf16[128,128], index: 5, kind: input, shape index: {}]
  %s6 = inlined_call_operand.vmem [shape: f32[1,128], index: 6, kind: input, shape index: {}]
  %s7 = inlined_call_operand.hbm [shape: f32[16,128], index: 7, kind: output, shape index: {}]
  %s8 = sld [smem:[#allocation0]]
  $region50: #{tpu_custom_call.1} parent=0
    _
  %s10 = ssub.s32 1, %s8
  %s11 = scalar_select 0, %s10, %s8
  $region1: #{tpu_custom_call.1} parent=0
    #allocation2 [shape = 'u8[8192]{0}', space=vmem, size = 0x2000, scoped, tag = 'input window, operand 0, single buffered']
    #allocation3 [shape = 's32[1]{0}', space=sflag, size = 0x4, scoped, tag = 'scoped memory for tpu_custom_call.1']
    #allocation4 [shape = 's32[1]{0}', space=sflag, size = 0x4, scoped, tag = 'scoped memory for tpu_custom_call.1']
    #allocation5 [shape = 'u8[32768]{0}', space=vmem, size = 0x8000, scoped, tag = 'input window, operand 3, single buffered']
    #allocation6 [shape = 's32[1]{0}', space=sflag, size = 0x4, scoped, tag = 'scoped memory for tpu_custom_call.1']
    #allocation7 [shape = 'u8[32768]{0}', space=vmem, size = 0x8000, scoped, tag = 'input window, operand 5, single buffered']
    #allocation8 [shape = 'u8[8192]{0}', space=vmem, size = 0x2000, scoped, tag = 'output window, operand 0, single buffered']
    %12 = vsyncpa [#allocation3], 0
    %13 = vsyncpa [#allocation6], 0
    %14 = vsyncpa [#allocation4], 0
    // Predicated region
    $region2: #{tpu_custom_call.1} parent=1 // pred_check
      _
    $region3: #{tpu_custom_call.1} parent=1 // pred_check_branch
      %16 = sbr.rel (0) target = $region5
    $region4: #{tpu_custom_call.1} parent=1 // pred_region
      %s18 = ssub.s32 256, 256
      %19 = vsyncadd [#allocation3], %s18
      %s20 = sshll.u32 [#allocation2], 4
      %s21 = int_to_ptr.vmem [resolvable:$true] %s20
      %26 = dma.hbm_to_vmem [thread:$0]  %s0, 256, %s21, [#allocation3], 128, 128, 8
    $region5: #{tpu_custom_call.1} parent=1 // pred_fallthru
      _
    // Predicated region
    $region6: #{tpu_custom_call.1} parent=1 // pred_check
      _
    $region7: #{tpu_custom_call.1} parent=1 // pred_check_branch
      %28 = sbr.rel (0) target = $region9
    $region8: #{tpu_custom_call.1} parent=1 // pred_region
      _
    $region9: #{tpu_custom_call.1} parent=1 // pred_fallthru
      _
    // Predicated region
    $region10: #{tpu_custom_call.1} parent=1 // pred_check
      _
    $region11: #{tpu_custom_call.1} parent=1 // pred_check_branch
      %30 = sbr.rel (0) target = $region13
    $region12: #{tpu_custom_call.1} parent=1 // pred_region
      _
    $region13: #{tpu_custom_call.1} parent=1 // pred_fallthru
      _
    // Predicated region
    $region14: #{tpu_custom_call.1} parent=1 // pred_check
      _
    $region15: #{tpu_custom_call.1} parent=1 // pred_check_branch
      %32 = sbr.rel (0) target = $region17
    $region16: #{tpu_custom_call.1} parent=1 // pred_region
      %s34 = ssub.s32 1024, 1024
      %35 = vsyncadd [#allocation6], %s34
      %s36 = sshll.u32 [#allocation5], 4
      %s37 = int_to_ptr.vmem [resolvable:$true] %s36
      %42 = dma.hbm_to_vmem [thread:$0]  %s3, 1024, %s37, [#allocation6], 64, 64, 4
    $region17: #{tpu_custom_call.1} parent=1 // pred_fallthru
      _
    // Predicated region
    $region18: #{tpu_custom_call.1} parent=1 // pred_check
      _
    $region19: #{tpu_custom_call.1} parent=1 // pred_check_branch
      %44 = sbr.rel (0) target = $region21
    $region20: #{tpu_custom_call.1} parent=1 // pred_region
      _
    $region21: #{tpu_custom_call.1} parent=1 // pred_fallthru
      _
    // Predicated region
    $region22: #{tpu_custom_call.1} parent=1 // pred_check
      _
    $region23: #{tpu_custom_call.1} parent=1 // pred_check_branch
      %46 = sbr.rel (0) target = $region25
    $region24: #{tpu_custom_call.1} parent=1 // pred_region
      %s48 = ssub.s32 1024, 1024
      %49 = vsyncadd [#allocation6], %s48
      %s50 = sshll.u32 [#allocation7], 4
      %s51 = int_to_ptr.vmem [resolvable:$true] %s50
      %56 = dma.hbm_to_vmem [thread:$0]  %s5, 1024, %s51, [#allocation6], 64, 64, 4
    $region25: #{tpu_custom_call.1} parent=1 // pred_fallthru
      _
    // Predicated region
    $region26: #{tpu_custom_call.1} parent=1 // pred_check
      _
    $region27: #{tpu_custom_call.1} parent=1 // pred_check_branch
      %58 = sbr.rel (0) target = $region29
    $region28: #{tpu_custom_call.1} parent=1 // pred_region
      _
    $region29: #{tpu_custom_call.1} parent=1 // pred_fallthru
      _
    // Predicated region
    $region30: #{tpu_custom_call.1} parent=1 // pred_check
      _
    $region31: #{tpu_custom_call.1} parent=1 // pred_check_branch
      %60 = sbr.rel (0) target = $region33
    $region32: #{tpu_custom_call.1} parent=1 // pred_region
      %61 = dma.done [#allocation3], 256
    $region33: #{tpu_custom_call.1} parent=1 // pred_fallthru
      _
    // Predicated region
    $region34: #{tpu_custom_call.1} parent=1 // pred_check
      _
    $region35: #{tpu_custom_call.1} parent=1 // pred_check_branch
      %63 = sbr.rel (0) target = $region37
    $region36: #{tpu_custom_call.1} parent=1 // pred_region
      %64 = dma.done [#allocation6], 1024
    $region37: #{tpu_custom_call.1} parent=1 // pred_fallthru
      _
    // Predicated region
    $region38: #{tpu_custom_call.1} parent=1 // pred_check
      _
    $region39: #{tpu_custom_call.1} parent=1 // pred_check_branch
      %66 = sbr.rel (0) target = $region41
    $region40: #{tpu_custom_call.1} parent=1 // pred_region
      %67 = dma.done [#allocation6], 1024
    $region41: #{tpu_custom_call.1} parent=1 // pred_fallthru
      _
    %v69 = vld [vmem:[#allocation2] sm:$0xff]
    %v70 = vld [vmem:[#allocation2 + $0x8] sm:$0xff]
    %71 = vadd.xlane.f32.xlu0 %v69
    %v72 = vpop.xlane.xlu0 %71
    %73 = vadd.xlane.f32.xlu0 %v70
    %v74 = vpop.xlane.xlu0 %73
    %v75 = vmul.f32 %v72, 0.03125
    %v76 = vmul.f32 %v74, 0.03125
    %v77 = vmul.f32 %v69, %v69
    %v78 = vmul.f32 %v70, %v70
    %79 = vadd.xlane.f32.xlu0 %v77
    %v80 = vpop.xlane.xlu0 %79
    %81 = vadd.xlane.f32.xlu0 %v78
    %v82 = vpop.xlane.xlu0 %81
    %v83 = vmul.f32 %v80, 0.03125
    %v84 = vmul.f32 %v82, 0.03125
    %v85 = vmul.f32 %v75, %v75
    %v86 = vmul.f32 %v76, %v76
    %v87 = vsub.f32 %v83, %v85
    %v88 = vsub.f32 %v84, %v86
    %v89 = vsub.f32 %v69, %v75
    %v90 = vsub.f32 %v70, %v76
    %v91 = vadd.f32 %v87, 1e-05
    %v92 = vadd.f32 %v88, 1e-05
    %v93 = vrsqrt.pop %v91
    %v94 = vrsqrt.pop %v92
    %v95 = vmul.f32 %v89, %v93
    %v96 = vmul.f32 %v90, %v94
    %v97 = vld [vmem:[%s1] sm:$0x1]
    %v99 = vlaneseq
    %v100 = vshrl.u32 %v99, 7
    %v101 = vsub.s32 0, %v100
    %v102 = vrot.slane %v97, %v101
    %v104 = vmul.f32 %v95, %v102
    %v105 = vmul.f32 %v96, %v102
    %v106 = vld [vmem:[%s2] sm:$0x1]
    %v108 = vlaneseq
    %v109 = vshrl.u32 %v108, 7
    %v110 = vsub.s32 0, %v109
    %v111 = vrot.slane %v106, %v110
    %v113 = vadd.f32 %v104, %v111
    %v114 = vadd.f32 %v105, %v111
    %v115 = vpack.c.bf16 %v114, %v113
    %v116 = vld [vmem:[#allocation5] sm:$0xf]
    %v117 = vld [vmem:[#allocation5 + $0x4] sm:$0xf]
    %v118 = vld [vmem:[#allocation5 + $0x8] sm:$0xf]
    %v119 = vld [vmem:[#allocation5 + $0xc] sm:$0xf]
    %v120 = vld [vmem:[#allocation5 + $0x10] sm:$0xf]
    %v121 = vld [vmem:[#allocation5 + $0x14] sm:$0xf]
    %v122 = vld [vmem:[#allocation5 + $0x18] sm:$0xf]
    %v123 = vld [vmem:[#allocation5 + $0x1c] sm:$0xf]
    %v124 = vld [vmem:[#allocation5 + $0x20] sm:$0xf]
    %v125 = vld [vmem:[#allocation5 + $0x24] sm:$0xf]
    %v126 = vld [vmem:[#allocation5 + $0x28] sm:$0xf]
    %v127 = vld [vmem:[#allocation5 + $0x2c] sm:$0xf]
    %v128 = vld [vmem:[#allocation5 + $0x30] sm:$0xf]
    %v129 = vld [vmem:[#allocation5 + $0x34] sm:$0xf]
    %v130 = vld [vmem:[#allocation5 + $0x38] sm:$0xf]
    %v131 = vld [vmem:[#allocation5 + $0x3c] sm:$0xf]
    %v132 = vld [vmem:[%s4] sm:$0x1]
    %v134 = vlaneseq
    %v135 = vshrl.u32 %v134, 7
    %v136 = vsub.s32 0, %v135
    %v137 = vrot.slane %v132, %v136
    %v155 = vunpack.c.l.b16 %v116
    %v156 = vunpack.c.l.b16 %v117
    %v157 = vunpack.c.l.b16 %v118
    %v158 = vunpack.c.l.b16 %v119
    %v159 = vunpack.c.l.b16 %v120
    %v160 = vunpack.c.l.b16 %v121
    %v161 = vunpack.c.l.b16 %v122
    %v162 = vunpack.c.l.b16 %v123
    %v163 = vunpack.c.l.b16 %v124
    %v164 = vunpack.c.l.b16 %v125
    %v165 = vunpack.c.l.b16 %v126
    %v166 = vunpack.c.l.b16 %v127
    %v167 = vunpack.c.l.b16 %v128
    %v168 = vunpack.c.l.b16 %v129
    %v169 = vunpack.c.l.b16 %v130
    %v170 = vunpack.c.l.b16 %v131
    %v171 = vpack.c.b16 %v156, %v155
    %v172 = vpack.c.b16 %v158, %v157
    %v173 = vpack.c.b16 %v160, %v159
    %v174 = vpack.c.b16 %v162, %v161
    %v175 = vpack.c.b16 %v164, %v163
    %v176 = vpack.c.b16 %v166, %v165
    %v177 = vpack.c.b16 %v168, %v167
    %v178 = vpack.c.b16 %v170, %v169
    %187 = vmatprep.subr.bf16.mxu0 0
    %188 = vmatpush1.bf16.msra.mxu0 %v178
    %189 = vmatprep.subr.bf16.mxu0 0
    %190 = vmatpush1.bf16.msra.mxu0 %v177
    %191 = vmatprep.subr.bf16.mxu0 0
    %192 = vmatpush1.bf16.msra.mxu0 %v176
    %193 = vmatprep.subr.bf16.mxu0 0
    %194 = vmatpush1.bf16.msra.mxu0 %v175
    %195 = vmatprep.subr.bf16.mxu0 0
    %196 = vmatpush1.bf16.msra.mxu0 %v174
    %197 = vmatprep.subr.bf16.mxu0 0
    %198 = vmatpush1.bf16.msra.mxu0 %v173
    %199 = vmatprep.subr.bf16.mxu0 0
    %200 = vmatpush1.bf16.msra.mxu0 %v172
    %201 = vmatprep.subr.bf16.mxu0 0
    %202 = vmatpush1.bf16.msra.mxu0 %v171
    %203 = vmatprep.subr.bf16.mxu0 0
    %204 = vmatpush2.bf16.msra.mxu0 0
    %205 = vmatprep.subr.bf16.mxu0 0
    %206 = vmatpush2.bf16.msra.mxu0 0
    %207 = vmatprep.subr.bf16.mxu0 0
    %208 = vmatpush2.bf16.msra.mxu0 0
    %209 = vmatprep.subr.bf16.mxu0 0
    %210 = vmatpush2.bf16.msra.mxu0 0
    %211 = vmatprep.subr.bf16.mxu0 0
    %212 = vmatpush2.bf16.msra.mxu0 0
    %213 = vmatprep.subr.bf16.mxu0 0
    %214 = vmatpush2.bf16.msra.mxu0 0
    %215 = vmatprep.subr.bf16.mxu0 0
    %216 = vmatpush2.bf16.msra.mxu0 0
    %217 = vmatprep.subr.bf16.mxu0 0
    %218 = vmatpush2.bf16.msra.mxu0 0
    %219 = vmatprep.mubr.bf16.mxu0 0
    %220 = vmatmul.mubr.bf16.gmra.mxu0 %v115
    %v221 = vpop.f32.mrf.mxu0
    %v222 = vadd.f32 %v137, %v221
    %v223 = vpop.f32.mrf.mxu0
    %v224 = vpop.f32.mrf.mxu0
    %v225 = vadd.f32 %v137, %v224
    %v226 = vpop.f32.mrf.mxu0
    %227 = vdwg.mxu0
    %v228 = vxor.u32 %v222, 2147483648
    %v229 = vxor.u32 %v225, 2147483648
    %v230 = vmul.f32 %v228, 1.442695
    %v231 = vpow.pop %v230
    %v232 = vmul.f32 %v229, 1.442695
    %v233 = vpow.pop %v232
    %v234 = vadd.f32 %v231, 1.0
    %v235 = vadd.f32 %v233, 1.0
    %v236 = vrcp.pop %v234
    %v237 = vmul.f32 1.0, %v236
    %v238 = vrcp.pop %v235
    %v239 = vmul.f32 1.0, %v238
    %v240 = vmul.f32 %v222, %v237
    %v241 = vmul.f32 %v225, %v239
    %v242 = vpack.c.bf16 %v241, %v240
    %v243 = vld [vmem:[#allocation7] sm:$0xf]
    %v244 = vld [vmem:[#allocation7 + $0x4] sm:$0xf]
    %v245 = vld [vmem:[#allocation7 + $0x8] sm:$0xf]
    %v246 = vld [vmem:[#allocation7 + $0xc] sm:$0xf]
    %v247 = vld [vmem:[#allocation7 + $0x10] sm:$0xf]
    %v248 = vld [vmem:[#allocation7 + $0x14] sm:$0xf]
    %v249 = vld [vmem:[#allocation7 + $0x18] sm:$0xf]
    %v250 = vld [vmem:[#allocation7 + $0x1c] sm:$0xf]
    %v251 = vld [vmem:[#allocation7 + $0x20] sm:$0xf]
    %v252 = vld [vmem:[#allocation7 + $0x24] sm:$0xf]
    %v253 = vld [vmem:[#allocation7 + $0x28] sm:$0xf]
    %v254 = vld [vmem:[#allocation7 + $0x2c] sm:$0xf]
    %v255 = vld [vmem:[#allocation7 + $0x30] sm:$0xf]
    %v256 = vld [vmem:[#allocation7 + $0x34] sm:$0xf]
    %v257 = vld [vmem:[#allocation7 + $0x38] sm:$0xf]
    %v258 = vld [vmem:[#allocation7 + $0x3c] sm:$0xf]
    %v259 = vld [vmem:[%s6] sm:$0x1]
    %v261 = vlaneseq
    %v262 = vshrl.u32 %v261, 7
    %v263 = vsub.s32 0, %v262
    %v264 = vrot.slane %v259, %v263
    %v282 = vunpack.c.l.b16 %v243
    %v283 = vunpack.c.l.b16 %v244
    %v284 = vunpack.c.l.b16 %v245
    %v285 = vunpack.c.l.b16 %v246
    %v286 = vunpack.c.l.b16 %v247
    %v287 = vunpack.c.l.b16 %v248
    %v288 = vunpack.c.l.b16 %v249
    %v289 = vunpack.c.l.b16 %v250
    %v290 = vunpack.c.l.b16 %v251
    %v291 = vunpack.c.l.b16 %v252
    %v292 = vunpack.c.l.b16 %v253
    %v293 = vunpack.c.l.b16 %v254
    %v294 = vunpack.c.l.b16 %v255
    %v295 = vunpack.c.l.b16 %v256
    %v296 = vunpack.c.l.b16 %v257
    %v297 = vunpack.c.l.b16 %v258
    %v298 = vpack.c.b16 %v283, %v282
    %v299 = vpack.c.b16 %v285, %v284
    %v300 = vpack.c.b16 %v287, %v286
    %v301 = vpack.c.b16 %v289, %v288
    %v302 = vpack.c.b16 %v291, %v290
    %v303 = vpack.c.b16 %v293, %v292
    %v304 = vpack.c.b16 %v295, %v294
    %v305 = vpack.c.b16 %v297, %v296
    %314 = vmatprep.subr.bf16.mxu0 0
    %315 = vmatpush1.bf16.msra.mxu0 %v305
    %316 = vmatprep.subr.bf16.mxu0 0
    %317 = vmatpush1.bf16.msra.mxu0 %v304
    %318 = vmatprep.subr.bf16.mxu0 0
    %319 = vmatpush1.bf16.msra.mxu0 %v303
    %320 = vmatprep.subr.bf16.mxu0 0
    %321 = vmatpush1.bf16.msra.mxu0 %v302
    %322 = vmatprep.subr.bf16.mxu0 0
    %323 = vmatpush1.bf16.msra.mxu0 %v301
    %324 = vmatprep.subr.bf16.mxu0 0
    %325 = vmatpush1.bf16.msra.mxu0 %v300
    %326 = vmatprep.subr.bf16.mxu0 0
    %327 = vmatpush1.bf16.msra.mxu0 %v299
    %328 = vmatprep.subr.bf16.mxu0 0
    %329 = vmatpush1.bf16.msra.mxu0 %v298
    %330 = vmatprep.subr.bf16.mxu0 0
    %331 = vmatpush2.bf16.msra.mxu0 0
    %332 = vmatprep.subr.bf16.mxu0 0
    %333 = vmatpush2.bf16.msra.mxu0 0
    %334 = vmatprep.subr.bf16.mxu0 0
    %335 = vmatpush2.bf16.msra.mxu0 0
    %336 = vmatprep.subr.bf16.mxu0 0
    %337 = vmatpush2.bf16.msra.mxu0 0
    %338 = vmatprep.subr.bf16.mxu0 0
    %339 = vmatpush2.bf16.msra.mxu0 0
    %340 = vmatprep.subr.bf16.mxu0 0
    %341 = vmatpush2.bf16.msra.mxu0 0
    %342 = vmatprep.subr.bf16.mxu0 0
    %343 = vmatpush2.bf16.msra.mxu0 0
    %344 = vmatprep.subr.bf16.mxu0 0
    %345 = vmatpush2.bf16.msra.mxu0 0
    %346 = vmatprep.mubr.bf16.mxu0 0
    %347 = vmatmul.mubr.bf16.gmra.mxu0 %v242
    %v348 = vpop.f32.mrf.mxu0
    %v349 = vadd.f32 %v264, %v348
    %v350 = vpop.f32.mrf.mxu0
    %v351 = vpop.f32.mrf.mxu0
    %v352 = vadd.f32 %v264, %v351
    %v353 = vpop.f32.mrf.mxu0
    %354 = vdwg.mxu0
    %355 = vst [vmem:[#allocation8] sm:$0xff] %v349
    %356 = vst [vmem:[#allocation8 + $0x8] sm:$0xff] %v352
    // Predicated region
    $region42: #{tpu_custom_call.1} parent=1 // pred_check
      _
    $region43: #{tpu_custom_call.1} parent=1 // pred_check_branch
      %358 = sbr.rel (0) target = $region45
    $region44: #{tpu_custom_call.1} parent=1 // pred_region
      %s360 = ssub.s32 256, 256
      %361 = vsyncadd [#allocation4], %s360
      %s362 = sshll.u32 [#allocation8], 4
      %s363 = int_to_ptr.vmem [resolvable:$true] %s362
      %368 = dma.vmem_to_hbm [thread:$0]  %s363, 256, %s7, [#allocation4], 128, 128, 8
    $region45: #{tpu_custom_call.1} parent=1 // pred_fallthru
      _
    // Predicated region
    $region46: #{tpu_custom_call.1} parent=1 // pred_check
      _
    $region47: #{tpu_custom_call.1} parent=1 // pred_check_branch
      %370 = sbr.rel (0) target = $region49
    $region48: #{tpu_custom_call.1} parent=1 // pred_region
      %371 = dma.done [#allocation4], 256
    $region49: #{tpu_custom_call.1} parent=1 // pred_fallthru
      _
    %372 = vsyncpa [#allocation3], 1
    %373 = vsyncpa [#allocation6], 1
    %374 = vsyncpa [#allocation4], 1

</llo_original>
